<compile_context>
chip_gen: v7x
topology: tpu7x:2x2x1
jax: 0.10.0
libtpu: 0.0.40
codegen_flags: <defaults>
</compile_context>

<pallas_src>
import jax
import jax.numpy as jnp
from jax import lax
from jax.experimental import pallas as pl
from jax.experimental.pallas import tpu as pltpu


def _round_up(x, m):
    return (x + m - 1) // m * m


def _pos_enc_add_kernel(order_ref, x_ref, pos_ref, out_ref):
    # order_ref: VMEM (TILE, 1) int32   gather indices for this row tile
    # x_ref / out_ref: VMEM (TILE, D)   row tile of the flattened input/output
    # pos_ref: VMEM (max_len, D)        full positional table (constant block)
    idx = order_ref[...]                                        # (TILE, 1)
    tile = idx.shape[0]
    max_len = pos_ref.shape[0]

    # Vectorized gather via one-hot matmul (VPU compare + MXU matmul).
    iota = lax.broadcasted_iota(jnp.int32, (tile, max_len), 1)  # (TILE, max_len)
    one_hot = (iota == idx).astype(jnp.float32)                 # (TILE, max_len)
    pe = jnp.dot(one_hot, pos_ref[...].astype(jnp.float32),
                 preferred_element_type=jnp.float32)            # (TILE, D)

    # Single lane-dense add + full-block store.
    out_ref[...] = (x_ref[...].astype(jnp.float32) + pe).astype(out_ref.dtype)


def positional_encoding_add(x, order, pos_enc, *, tile_rows=512):
    """Equivalent of PositionalEncoding.forward(x, order) = pos_enc[order] + x."""
    if order is None:           # mirrors the PyTorch early-return
        return x
    B, L, D = x.shape
    max_len = pos_enc.shape[0]
    N = B * L

    # Flatten (B, L) -> rows; reshape is free, enables big row tiles.
    x2 = x.reshape(N, D)
    ord2 = order.reshape(N, 1).astype(jnp.int32)

    tile = min(_round_up(tile_rows, 8), _round_up(N, 8))
    n_pad = _round_up(N, tile)
    if n_pad != N:
        x2 = jnp.pad(x2, ((0, n_pad - N), (0, 0)))
        ord2 = jnp.pad(ord2, ((0, n_pad - N), (0, 0)))

    out = pl.pallas_call(
        _pos_enc_add_kernel,
        out_shape=jax.ShapeDtypeStruct((n_pad, D), x.dtype),
        grid_spec=pl.GridSpec(
            grid=(n_pad // tile,),
            in_specs=[
                pl.BlockSpec((tile, 1), lambda i: (i, 0)),     # order indices
                pl.BlockSpec((tile, D), lambda i: (i, 0)),     # x row tile
                pl.BlockSpec((max_len, D), lambda i: (0, 0)),  # full PE table
            ],
            out_specs=pl.BlockSpec((tile, D), lambda i: (i, 0)),
        ),
        compiler_params=pltpu.CompilerParams(
            dimension_semantics=("parallel",),   # lets v7x shard tiles across TCs
        ),
    )(ord2, x2, pos_enc)

    return out[:N].reshape(B, L, D)


if __name__ == "__main__":
    key = jax.random.PRNGKey(0)

    # --- case 1: small shapes matching the module's typical use ----------
    B, L, D, MAX_LEN = 2, 8, 128, 16
    k_pe, k_x, k_ord, key = jax.random.split(key, 4)
    # trainable=True -> pos_enc = randn(max_len, dim), deterministic init here
    pos_enc = jax.random.normal(k_pe, (MAX_LEN, D), dtype=jnp.float32)
    x = jax.random.normal(k_x, (B, L, D), dtype=jnp.float32)
    order = jax.random.randint(k_ord, (B, L), 0, MAX_LEN, dtype=jnp.int32)

    out = jax.block_until_ready(positional_encoding_add(x, order, pos_enc))
    ref = pos_enc[order] + x
    assert out.shape == (B, L, D) and out.dtype == x.dtype
    assert jnp.allclose(out, ref, atol=1e-5), "Pallas kernel mismatch (case 1)"

    # --- case 2: exercises row padding + multi-step grid + non-128 dim ---
    B2, L2, D2, MAX_LEN2 = 3, 50, 64, 40
    k_pe2, k_x2, k_ord2, key = jax.random.split(key, 4)
    pos_enc2 = jax.random.normal(k_pe2, (MAX_LEN2, D2), dtype=jnp.float32)
    x2 = jax.random.normal(k_x2, (B2, L2, D2), dtype=jnp.float32)
    order2 = jax.random.randint(k_ord2, (B2, L2), 0, MAX_LEN2, dtype=jnp.int32)

    out2 = jax.block_until_ready(
        positional_encoding_add(x2, order2, pos_enc2, tile_rows=64))
    ref2 = pos_enc2[order2] + x2
    assert out2.shape == (B2, L2, D2)
    assert jnp.allclose(out2, ref2, atol=1e-5), "Pallas kernel mismatch (case 2)"

    print("KERNEL_OK")
</pallas_src>

<mosaic_0001>
module attributes {stable_mosaic.version = 11 : i64} {
  func.func @_pos_enc_add_kernel(%arg0: i32, %arg1: memref<16x1xi32, #tpu.memory_space<vmem>>, %arg2: memref<16x128xf32, #tpu.memory_space<vmem>>, %arg3: memref<16x128xf32, #tpu.memory_space<vmem>>, %arg4: memref<16x128xf32, #tpu.memory_space<vmem>>) attributes {dimension_semantics = [#tpu.dimension_semantics<parallel>], iteration_bounds = array<i64: 1>, scalar_prefetch = 0 : i64, scratch_operands = 0 : i64, tpu.core_type = #tpu.core_type<tc>, window_params = [{transform_indices = @transform_0, window_bounds = array<i64: 16, 1>}, {transform_indices = @transform_1, window_bounds = array<i64: 16, 128>}, {pipeline_mode = #tpu.pipeline_mode<synchronous>, transform_indices = @transform_2, window_bounds = array<i64: 16, 128>}, {transform_indices = @transform_3, window_bounds = array<i64: 16, 128>}]} {
    %c0 = arith.constant 0 : index
    %c0_0 = arith.constant 0 : index
    %0 = vector.load %arg1[%c0, %c0_0] : memref<16x1xi32, #tpu.memory_space<vmem>>, vector<16x1xi32>
    %1 = tpu.iota {dimensions = array<i32: 1>} : vector<16x16xi32>
    %2 = vector.broadcast %0 : vector<16x1xi32> to vector<16x16xi32>
    %3 = arith.cmpi eq, %1, %2 : vector<16x16xi32>
    %4 = arith.extui %3 : vector<16x16xi1> to vector<16x16xi32>
    %5 = arith.sitofp %4 : vector<16x16xi32> to vector<16x16xf32>
    %c0_1 = arith.constant 0 : index
    %c0_2 = arith.constant 0 : index
    %6 = vector.load %arg3[%c0_1, %c0_2] : memref<16x128xf32, #tpu.memory_space<vmem>>, vector<16x128xf32>
    %cst = arith.constant dense<0.000000e+00> : vector<16x128xf32>
    %7 = tpu.matmul %5, %6, %cst {dimension_numbers = #tpu.dot_dimension_numbers<[1], [0], [0], [1], [0, 0, 1, 1], [], []>} : vector<16x16xf32>, vector<16x128xf32>, vector<16x128xf32> -> vector<16x128xf32>
    %c0_3 = arith.constant 0 : index
    %c0_4 = arith.constant 0 : index
    %8 = vector.load %arg2[%c0_3, %c0_4] : memref<16x128xf32, #tpu.memory_space<vmem>>, vector<16x128xf32>
    %9 = arith.addf %8, %7 : vector<16x128xf32>
    %c0_5 = arith.constant 0 : index
    %c0_6 = arith.constant 0 : index
    %10 = vector.load %arg4[%c0_5, %c0_6] : memref<16x128xf32, #tpu.memory_space<vmem>>, vector<16x128xf32>
    tpu.vector_store %arg4[%c0_5, %c0_6], %9 {strides = array<i32>} : memref<16x128xf32, #tpu.memory_space<vmem>>, vector<16x128xf32>,
    return
  }
  func.func @transform_0(%arg0: i32) -> (i32, i32) {
    %c0_i32 = arith.constant 0 : i32
    %c0_i32_0 = arith.constant 0 : i32
    return %arg0, %c0_i32 : i32, i32
  }
  func.func @transform_1(%arg0: i32) -> (i32, i32) {
    %c0_i32 = arith.constant 0 : i32
    %c0_i32_0 = arith.constant 0 : i32
    return %arg0, %c0_i32 : i32, i32
  }
  func.func @transform_2(%arg0: i32) -> (i32, i32) {
    %c0_i32 = arith.constant 0 : i32
    %c0_i32_0 = arith.constant 0 : i32
    %c0_i32_1 = arith.constant 0 : i32
    return %c0_i32, %c0_i32_0 : i32, i32
  }
  func.func @transform_3(%arg0: i32) -> (i32, i32) {
    %c0_i32 = arith.constant 0 : i32
    %c0_i32_0 = arith.constant 0 : i32
    return %arg0, %c0_i32 : i32, i32
  }
}

</mosaic_0001>

<llo_original>
// kernel: tpu_custom_call.1
$region0: #{tpu_custom_call.1}
  #allocation0 [shape = 'u32[]', space=smem, size = 0x4, offset = 0x4, fixed_abs, tag = 'smem constant byte address 0x4 - core index']
  #allocation1 [shape = 'u32[144,128]{1,0:T(1,128)}', space=vmem, size = 0x12000, scoped, tag = 'internal scratch']
  %s0 = inlined_call_operand.vmem [shape: s32[16,1], index: 0, kind: input, shape index: {}]
  %s1 = inlined_call_operand.vmem [shape: f32[16,128], index: 1, kind: input, shape index: {}]
  %s2 = inlined_call_operand.hbm [shape: f32[16,128], index: 2, kind: input, shape index: {}]
  %s3 = inlined_call_operand.hbm [shape: f32[16,128], index: 3, kind: output, shape index: {}]
  %s4 = sld [smem:[#allocation0]]
  $region26: #{tpu_custom_call.1} parent=0
    _
  %s6 = ssub.s32 1, %s4
  %s7 = scalar_select 0, %s6, %s4
  $region1: #{tpu_custom_call.1} parent=0
    #allocation2 [shape = 'u8[8192]{0}', space=vmem, size = 0x2000, scoped, tag = 'input window, operand 2, single buffered']
    #allocation3 [shape = 's32[1]{0}', space=sflag, size = 0x4, scoped, tag = 'scoped memory for tpu_custom_call.1']
    #allocation4 [shape = 's32[1]{0}', space=sflag, size = 0x4, scoped, tag = 'scoped memory for tpu_custom_call.1']
    #allocation5 [shape = 'u8[8192]{0}', space=vmem, size = 0x2000, scoped, tag = 'output window, operand 0, single buffered']
    %8 = vsyncpa [#allocation3], 0
    %9 = vsyncpa [#allocation4], 0
    // Predicated region
    $region2: #{tpu_custom_call.1} parent=1 // pred_check
      _
    $region3: #{tpu_custom_call.1} parent=1 // pred_check_branch
      %11 = sbr.rel (0) target = $region5
    $region4: #{tpu_custom_call.1} parent=1 // pred_region
      _
    $region5: #{tpu_custom_call.1} parent=1 // pred_fallthru
      _
    // Predicated region
    $region6: #{tpu_custom_call.1} parent=1 // pred_check
      _
    $region7: #{tpu_custom_call.1} parent=1 // pred_check_branch
      %13 = sbr.rel (0) target = $region9
    $region8: #{tpu_custom_call.1} parent=1 // pred_region
      _
    $region9: #{tpu_custom_call.1} parent=1 // pred_fallthru
      _
    // Predicated region
    $region10: #{tpu_custom_call.1} parent=1 // pred_check
      _
    $region11: #{tpu_custom_call.1} parent=1 // pred_check_branch
      %15 = sbr.rel (0) target = $region13
    $region12: #{tpu_custom_call.1} parent=1 // pred_region
      %s17 = ssub.s32 256, 256
      %18 = vsyncadd [#allocation3], %s17
      %s19 = sshll.u32 [#allocation2], 4
      %s20 = int_to_ptr.vmem [resolvable:$true] %s19
      %25 = dma.hbm_to_vmem [thread:$0]  %s2, 256, %s20, [#allocation3], 128, 128, 8
    $region13: #{tpu_custom_call.1} parent=1 // pred_fallthru
      _
    // Predicated region
    $region14: #{tpu_custom_call.1} parent=1 // pred_check
      _
    $region15: #{tpu_custom_call.1} parent=1 // pred_check_branch
      %27 = sbr.rel (0) target = $region17
    $region16: #{tpu_custom_call.1} parent=1 // pred_region
      %28 = dma.done [#allocation3], 256
    $region17: #{tpu_custom_call.1} parent=1 // pred_fallthru
      _
    %v29 = vld [vmem:[%s0] sm:$0xff]
    %v30 = vld [vmem:[%s0 + $0x8] sm:$0xff]
    %v31 = vlaneseq
    %v32 = vand.u32 %v31, 127
    %33 = vset.pattern.permute.xlu0 0
    %34 = vperm.xlu0 %33, %v29
    %v35 = vpop.permute.xlu0 %34
    %36 = vset.pattern.permute.xlu0 0
    %37 = vperm.xlu0 %36, %v30
    %v38 = vpop.permute.xlu0 %37
    %vm39 = vcmp.eq.s32.totalorder %v32, %v35
    %vm40 = vcmp.eq.s32.totalorder %v32, %v38
    %v41 = vsel %vm39, 1, 0
    %v42 = vsel %vm40, 1, 0
    %v43 = vcvt.s32.f32 %v41
    %v44 = vcvt.s32.f32 %v42
    %v45 = vld [vmem:[#allocation2] sm:$0xff]
    %v46 = vld [vmem:[#allocation2 + $0x8] sm:$0xff]
    %vm47 = vcmask 130048
    %v49 = vsel %vm47, %v43, 0
    %v52 = vsel %vm47, %v44, 0
    %54 = vmatprep.subr.mxu0 0.0
    %55 = vmatpush1.msra.mxu0 %v45
    %56 = vmatprep.subr.mxu0 0.0
    %57 = vmatpush1.msra.mxu0 %v46
    %58 = vmatprep.subr.mxu0 0.0
    %59 = vmatpush1.msra.mxu0 0.0
    %60 = vmatprep.subr.mxu0 0.0
    %61 = vmatpush1.msra.mxu0 0.0
    %62 = vmatprep.subr.mxu0 0.0
    %63 = vmatpush1.msra.mxu0 0.0
    %64 = vmatprep.subr.mxu0 0.0
    %65 = vmatpush1.msra.mxu0 0.0
    %66 = vmatprep.subr.mxu0 0.0
    %67 = vmatpush1.msra.mxu0 0.0
    %68 = vmatprep.subr.mxu0 0.0
    %69 = vmatpush1.msra.mxu0 0.0
    %70 = vmatprep.subr.mxu0 0.0
    %71 = vmatpush1.msra.mxu0 0.0
    %72 = vmatprep.subr.mxu0 0.0
    %73 = vmatpush1.msra.mxu0 0.0
    %74 = vmatprep.subr.mxu0 0.0
    %75 = vmatpush1.msra.mxu0 0.0
    %76 = vmatprep.subr.mxu0 0.0
    %77 = vmatpush1.msra.mxu0 0.0
    %78 = vmatprep.subr.mxu0 0.0
    %79 = vmatpush1.msra.mxu0 0.0
    %80 = vmatprep.subr.mxu0 0.0
    %81 = vmatpush1.msra.mxu0 0.0
    %82 = vmatprep.subr.mxu0 0.0
    %83 = vmatpush1.msra.mxu0 0.0
    %84 = vmatprep.subr.mxu0 0.0
    %85 = vmatpush1.msra.mxu0 0.0
    %86 = vmatprep.subr.mxu0 0.0
    %87 = vmatpush1.msra.mxu0 0.0
    %88 = vmatprep.subr.mxu0 0.0
    %89 = vmatpush1.msra.mxu0 0.0
    %90 = vmatprep.subr.mxu0 0.0
    %91 = vmatpush1.msra.mxu0 0.0
    %92 = vmatprep.subr.mxu0 0.0
    %93 = vmatpush1.msra.mxu0 0.0
    %94 = vmatprep.subr.mxu0 0.0
    %95 = vmatpush1.msra.mxu0 0.0
    %96 = vmatprep.subr.mxu0 0.0
    %97 = vmatpush1.msra.mxu0 0.0
    %98 = vmatprep.subr.mxu0 0.0
    %99 = vmatpush1.msra.mxu0 0.0
    %100 = vmatprep.subr.mxu0 0.0
    %101 = vmatpush1.msra.mxu0 0.0
    %102 = vmatprep.subr.mxu0 0.0
    %103 = vmatpush1.msra.mxu0 0.0
    %104 = vmatprep.subr.mxu0 0.0
    %105 = vmatpush1.msra.mxu0 0.0
    %106 = vmatprep.subr.mxu0 0.0
    %107 = vmatpush1.msra.mxu0 0.0
    %108 = vmatprep.subr.mxu0 0.0
    %109 = vmatpush1.msra.mxu0 0.0
    %110 = vmatprep.subr.mxu0 0.0
    %111 = vmatpush1.msra.mxu0 0.0
    %112 = vmatprep.subr.mxu0 0.0
    %113 = vmatpush1.msra.mxu0 0.0
    %114 = vmatprep.subr.mxu0 0.0
    %115 = vmatpush1.msra.mxu0 0.0
    %116 = vmatprep.subr.mxu0 0.0
    %117 = vmatpush1.msra.mxu0 0.0
    %118 = vmatprep.mubr.f32.mxu0 0.0
    %119 = vmatmul.mubr.f32.gmra.mrb[0].mxu0 %v49
    %v120 = vpop.f32.mrb[0].mxu0
    %v121 = vadd.f32 0.0, %v120
    %v122 = vpop.f32.mrb[0].mxu0
    %123 = vmatprep.mubr.f32.mxu0 0.0
    %124 = vmatmul.mubr.f32.gmra.mrb[0].mxu0 %v52
    %v125 = vpop.f32.mrb[0].mxu0
    %v126 = vadd.f32 0.0, %v125
    %v127 = vpop.f32.mrb[0].mxu0
    %128 = vdwg.mxu0
    %v129 = vld [vmem:[%s1] sm:$0xff]
    %v130 = vld [vmem:[%s1 + $0x8] sm:$0xff]
    %v131 = vadd.f32 %v129, %v121
    %v132 = vadd.f32 %v130, %v126
    %133 = vst [vmem:[#allocation5] sm:$0xff] %v131
    %134 = vst [vmem:[#allocation5 + $0x8] sm:$0xff] %v132
    // Predicated region
    $region18: #{tpu_custom_call.1} parent=1 // pred_check
      _
    $region19: #{tpu_custom_call.1} parent=1 // pred_check_branch
      %136 = sbr.rel (0) target = $region21
    $region20: #{tpu_custom_call.1} parent=1 // pred_region
      %s138 = ssub.s32 256, 256
      %139 = vsyncadd [#allocation4], %s138
      %s140 = sshll.u32 [#allocation5], 4
      %s141 = int_to_ptr.vmem [resolvable:$true] %s140
      %146 = dma.vmem_to_hbm [thread:$0]  %s141, 256, %s3, [#allocation4], 128, 128, 8
    $region21: #{tpu_custom_call.1} parent=1 // pred_fallthru
      _
    // Predicated region
    $region22: #{tpu_custom_call.1} parent=1 // pred_check
      _
    $region23: #{tpu_custom_call.1} parent=1 // pred_check_branch
      %148 = sbr.rel (0) target = $region25
    $region24: #{tpu_custom_call.1} parent=1 // pred_region
      %149 = dma.done [#allocation4], 256
    $region25: #{tpu_custom_call.1} parent=1 // pred_fallthru
      _
    %150 = vsyncpa [#allocation3], 1
    %151 = vsyncpa [#allocation4], 1

</llo_original>
